<compile_context>
chip_gen: v5e
topology: v5e:2x2
jax: 0.10.0
libtpu: 0.0.40
codegen_flags: <defaults>
</compile_context>

<pallas_src>
import functools

import jax
import jax.numpy as jnp
from jax import lax
from jax.experimental import pallas as pl
from jax.experimental.pallas import tpu as pltpu


def _layernorm_kernel(x_ref, w_ref, b_ref, o_ref, *, eps: float):
    # x_ref: (tile_rows, d_model), w_ref/b_ref: (1, d_model)
    x = x_ref[...].astype(jnp.float32)
    mean = jnp.mean(x, axis=-1, keepdims=True)
    # Population variance (matches torch.var_mean(..., unbiased=False)).
    centered = x - mean
    var = jnp.mean(centered * centered, axis=-1, keepdims=True)
    inv_std = lax.rsqrt(var + eps)
    y = centered * inv_std * w_ref[...].astype(jnp.float32) + b_ref[...].astype(jnp.float32)
    o_ref[...] = y.astype(o_ref.dtype)


def _choose_tile_rows(rows: int, d_model: int, itemsize: int,
                      target_bytes: int = 4 << 20, max_rows: int = 2048) -> int:
    """Pick a sublane-aligned row tile sized for HBM-bandwidth efficiency."""
    # Sublane packing granularity: 8 for f32, 16 for bf16, 32 for int8/fp8.
    pack = max(8, 32 // max(itemsize, 1))
    tile = target_bytes // max(d_model * itemsize, 1)
    tile = max(pack, min(tile, max_rows))
    tile = (tile // pack) * pack
    rows_padded = ((rows + pack - 1) // pack) * pack
    tile = min(tile, rows_padded)
    # Prefer >= 2 grid steps so v7x's two TensorCores both get work
    # (no-op on v5e/v6e, which have a single TC per chip).
    if pl.cdiv(rows, tile) < 2 and rows_padded >= 2 * pack:
        tile = max(pack, (rows_padded // 2 // pack) * pack)
    return tile


def layernorm_pallas(residual: jax.Array, w: jax.Array, b: jax.Array,
                     eps: float = 1e-5, tile_rows: int | None = None) -> jax.Array:
    """residual: [batch, posn, d_model]; w, b: [d_model]."""
    batch, posn, d_model = residual.shape
    rows = batch * posn

    # Keep the output lane-dense; d_model=768 in the reference config is fine.
    assert d_model % 128 == 0, (
        f"d_model={d_model} must be a multiple of 128 (lane width); pad the "
        "feature dim in the caller for non-aligned sizes.")

    itemsize = jnp.dtype(residual.dtype).itemsize
    if tile_rows is None:
        tile_rows = _choose_tile_rows(rows, d_model, itemsize)

    x2d = residual.reshape(rows, d_model)
    w2d = w.reshape(1, d_model)
    b2d = b.reshape(1, d_model)

    grid = (pl.cdiv(rows, tile_rows),)  # uneven tail block handled by Pallas
                                        # (rows are independent, so padded rows
                                        #  never contaminate valid outputs).

    # VMEM budget: double-buffered x + out tiles plus the (tiny) w/b blocks,
    # with ~25% headroom.  Capped at 48 MiB so it always fits v7x's 64 MiB
    # physical VMEM; with the 4 MiB tile target we stay around ~20 MiB.
    tile_bytes = tile_rows * d_model * itemsize
    wb_bytes = 2 * 2 * d_model * max(jnp.dtype(w.dtype).itemsize,
                                     jnp.dtype(b.dtype).itemsize)
    needed = 2 * (tile_bytes + tile_bytes) + wb_bytes
    vmem_limit = int(min(max(needed * 1.25, 8 << 20), 48 << 20))

    kernel = functools.partial(_layernorm_kernel, eps=eps)

    out2d = pl.pallas_call(
        kernel,
        out_shape=jax.ShapeDtypeStruct((rows, d_model), residual.dtype),
        grid_spec=pltpu.PrefetchScalarGridSpec(
            num_scalar_prefetch=0,
            grid=grid,
            in_specs=[
                pl.BlockSpec((tile_rows, d_model), lambda i: (i, 0)),
                pl.BlockSpec((1, d_model), lambda i: (0, 0)),
                pl.BlockSpec((1, d_model), lambda i: (0, 0)),
            ],
            out_specs=pl.BlockSpec((tile_rows, d_model), lambda i: (i, 0)),
        ),
        compiler_params=pltpu.CompilerParams(
            dimension_semantics=("parallel",),
            vmem_limit_bytes=vmem_limit,
        ),
    )(x2d, w2d, b2d)

    return out2d.reshape(batch, posn, d_model)


def _reference_layernorm(residual, w, b, eps):
    mean = jnp.mean(residual, axis=-1, keepdims=True)
    var = jnp.mean((residual - mean) ** 2, axis=-1, keepdims=True)
    return (residual - mean) / jnp.sqrt(var + eps) * w + b


if __name__ == "__main__":
    # Small shapes consistent with the module: batch=2, posn=8, d_model=768.
    batch, posn, d_model = 2, 8, 768
    eps = 1e-5

    key = jax.random.PRNGKey(0)
    residual = jax.random.normal(key, (batch, posn, d_model), dtype=jnp.float32)

    # Deterministic parameter init matching LayerNorm.__init__: w = ones, b = zeros.
    w = jnp.ones((d_model,), dtype=jnp.float32)
    b = jnp.zeros((d_model,), dtype=jnp.float32)

    out = layernorm_pallas(residual, w, b, eps=eps)
    out = jax.block_until_ready(out)
    ref = _reference_layernorm(residual, w, b, eps)
    assert jnp.allclose(out, ref, atol=1e-5, rtol=1e-5), "mismatch vs reference"

    # Ragged row count (rows not divisible by tile_rows) exercises the cdiv
    # grid + padded tail block path.
    residual2 = jax.random.normal(jax.random.PRNGKey(0), (2, 13, d_model),
                                  dtype=jnp.float32)
    out2 = jax.block_until_ready(layernorm_pallas(residual2, w, b, eps=eps))
    ref2 = _reference_layernorm(residual2, w, b, eps)
    assert jnp.allclose(out2, ref2, atol=1e-5, rtol=1e-5), "mismatch (ragged rows)"

    print("KERNEL_OK")
</pallas_src>

<mosaic_0001>
module attributes {stable_mosaic.version = 11 : i64} {
  func.func @_layernorm_kernel(%arg0: i32, %arg1: memref<8x768xf32, #tpu.memory_space<vmem>>, %arg2: memref<1x768xf32, #tpu.memory_space<vmem>>, %arg3: memref<1x768xf32, #tpu.memory_space<vmem>>, %arg4: memref<8x768xf32, #tpu.memory_space<vmem>>) attributes {dimension_semantics = [#tpu.dimension_semantics<parallel>], iteration_bounds = array<i64: 2>, scalar_prefetch = 0 : i64, scratch_operands = 0 : i64, tpu.core_type = #tpu.core_type<tc>, window_params = [{transform_indices = @transform_0, window_bounds = array<i64: 8, 768>}, {pipeline_mode = #tpu.pipeline_mode<synchronous>, transform_indices = @transform_1, window_bounds = array<i64: 1, 768>}, {pipeline_mode = #tpu.pipeline_mode<synchronous>, transform_indices = @transform_2, window_bounds = array<i64: 1, 768>}, {transform_indices = @transform_3, window_bounds = array<i64: 8, 768>}]} {
    %c0 = arith.constant 0 : index
    %c0_0 = arith.constant 0 : index
    %0 = vector.load %arg1[%c0, %c0_0] : memref<8x768xf32, #tpu.memory_space<vmem>>, vector<8x768xf32>
    %cst = arith.constant dense<0.000000e+00> : vector<8xf32>
    %1 = vector.multi_reduction <add>, %0, %cst [1] : vector<8x768xf32> to vector<8xf32>
    %2 = vector.shape_cast %1 : vector<8xf32> to vector<8x1xf32>
    %cst_1 = arith.constant 7.680000e+02 : f32
    %3 = vector.broadcast %cst_1 : f32 to vector<8x1xf32>
    %4 = arith.divf %2, %3 : vector<8x1xf32>
    %5 = vector.broadcast %4 : vector<8x1xf32> to vector<8x768xf32>
    %6 = arith.subf %0, %5 : vector<8x768xf32>
    %7 = arith.mulf %6, %6 : vector<8x768xf32>
    %cst_2 = arith.constant dense<0.000000e+00> : vector<8xf32>
    %8 = vector.multi_reduction <add>, %7, %cst_2 [1] : vector<8x768xf32> to vector<8xf32>
    %9 = vector.shape_cast %8 : vector<8xf32> to vector<8x1xf32>
    %cst_3 = arith.constant 7.680000e+02 : f32
    %10 = vector.broadcast %cst_3 : f32 to vector<8x1xf32>
    %11 = arith.divf %9, %10 : vector<8x1xf32>
    %cst_4 = arith.constant 9.99999974E-6 : f32
    %12 = vector.broadcast %cst_4 : f32 to vector<8x1xf32>
    %13 = arith.addf %11, %12 : vector<8x1xf32>
    %14 = math.rsqrt %13 : vector<8x1xf32>
    %15 = vector.broadcast %14 : vector<8x1xf32> to vector<8x768xf32>
    %16 = arith.mulf %6, %15 : vector<8x768xf32>
    %c0_5 = arith.constant 0 : index
    %c0_6 = arith.constant 0 : index
    %17 = vector.load %arg2[%c0_5, %c0_6] : memref<1x768xf32, #tpu.memory_space<vmem>>, vector<1x768xf32>
    %18 = vector.broadcast %17 : vector<1x768xf32> to vector<8x768xf32>
    %19 = arith.mulf %16, %18 : vector<8x768xf32>
    %c0_7 = arith.constant 0 : index
    %c0_8 = arith.constant 0 : index
    %20 = vector.load %arg3[%c0_7, %c0_8] : memref<1x768xf32, #tpu.memory_space<vmem>>, vector<1x768xf32>
    %21 = vector.broadcast %20 : vector<1x768xf32> to vector<8x768xf32>
    %22 = arith.addf %19, %21 : vector<8x768xf32>
    %c0_9 = arith.constant 0 : index
    %c0_10 = arith.constant 0 : index
    %23 = vector.load %arg4[%c0_9, %c0_10] : memref<8x768xf32, #tpu.memory_space<vmem>>, vector<8x768xf32>
    tpu.vector_store %arg4[%c0_9, %c0_10], %22 {strides = array<i32>} : memref<8x768xf32, #tpu.memory_space<vmem>>, vector<8x768xf32>,
    return
  }
  func.func @transform_0(%arg0: i32) -> (i32, i32) {
    %c0_i32 = arith.constant 0 : i32
    %c0_i32_0 = arith.constant 0 : i32
    return %arg0, %c0_i32 : i32, i32
  }
  func.func @transform_1(%arg0: i32) -> (i32, i32) {
    %c0_i32 = arith.constant 0 : i32
    %c0_i32_0 = arith.constant 0 : i32
    %c0_i32_1 = arith.constant 0 : i32
    return %c0_i32, %c0_i32_0 : i32, i32
  }
  func.func @transform_2(%arg0: i32) -> (i32, i32) {
    %c0_i32 = arith.constant 0 : i32
    %c0_i32_0 = arith.constant 0 : i32
    %c0_i32_1 = arith.constant 0 : i32
    return %c0_i32, %c0_i32_0 : i32, i32
  }
  func.func @transform_3(%arg0: i32) -> (i32, i32) {
    %c0_i32 = arith.constant 0 : i32
    %c0_i32_0 = arith.constant 0 : i32
    return %arg0, %c0_i32 : i32, i32
  }
}

</mosaic_0001>

<llo_original>
// kernel: tpu_custom_call.1
$region0: #{tpu_custom_call.1}
  #allocation0 [shape = 'u32[]', space=smem, size = 0x4, offset = 0x4, fixed_abs, tag = 'smem constant byte address 0x4 - core index']
  #allocation1 [shape = 'u32[72,128]{1,0:T(1,128)}', space=vmem, size = 0x9000, scoped, tag = 'internal scratch']
  %s0 = inlined_call_operand.hbm [shape: f32[16,768], index: 0, kind: input, shape index: {}]
  %s1 = inlined_call_operand.hbm [shape: f32[1,768], index: 1, kind: input, shape index: {}]
  %s2 = inlined_call_operand.hbm [shape: f32[1,768], index: 2, kind: input, shape index: {}]
  %s3 = inlined_call_operand.hbm [shape: f32[16,768], index: 3, kind: output, shape index: {}]
  %s4 = sld [smem:[#allocation0]]
  $region57: #{tpu_custom_call.1} parent=0
    _
  %s6 = ssub.s32 1, %s4
  %s7 = scalar_select 0, %s6, %s4
  $region1: #{tpu_custom_call.1} parent=0
    #allocation2 [shape = 'u8[49152]{0}', space=vmem, size = 0xc000, scoped, tag = 'input window, operand 0']
    #allocation3 [shape = 's32[2]{0}', space=sflag, size = 0x8, scoped, tag = 'scoped memory for tpu_custom_call.1']
    #allocation4 [shape = 's32[2]{0}', space=sflag, size = 0x8, scoped, tag = 'scoped memory for tpu_custom_call.1']
    #allocation5 [shape = 'u8[3072]{0}', space=vmem, size = 0xc00, scoped, tag = 'input window, operand 1, single buffered']
    #allocation6 [shape = 's32[1]{0}', space=sflag, size = 0x4, scoped, tag = 'scoped memory for tpu_custom_call.1']
    #allocation7 [shape = 'u8[3072]{0}', space=vmem, size = 0xc00, scoped, tag = 'input window, operand 2, single buffered']
    #allocation8 [shape = 'u8[49152]{0}', space=vmem, size = 0xc000, scoped, tag = 'output window, operand 0']
    %8 = vsyncpa [#allocation3], 0
    %s9 = scalar_lea.sflag [#allocation3], 1
    %10 = vsyncpa %s9, 0
    %11 = vsyncpa [#allocation6], 0
    %12 = vsyncpa [#allocation4], 0
    %s13 = scalar_lea.sflag [#allocation4], 1
    %14 = vsyncpa %s13, 0
    loop: start=0, step=1, limit=4
    $region2: #{tpu_custom_call.1} parent=1 // loop_pre_header
      _
    $region3: #{tpu_custom_call.1} parent=1 // loop_header
      %s16 = sphi 0, %s20
      %p17 = scmp.ge.s32.totalorder %s16, 4
      %s26 = sphi 0, %s28
      %s29 = sphi 0, %s26
      %s30 = sphi 0, %s29
      %s46 = sphi 0, %s30
      %s50 = sphi 0, %s50
      %s52 = sphi 0, %s50
      %s53 = sphi 0, %s52
      %s67 = sphi 0, %s53
      %s71 = sphi 0, %s71
      %s73 = sphi 0, %s71
      %s74 = sphi 0, %s73
      %s88 = sphi 0, %s74
      %s94 = sphi 0, %s96
      %s97 = sphi 0, %s94
      %s98 = sphi 0, %s97
      %s114 = sphi 0, %s98
    $region4: #{tpu_custom_call.1} parent=1 // loop_header_branch
      %19 = sbr.rel (%p17) target = $region8
    $region5: #{tpu_custom_call.1} parent=1 // loop_body
      %s21 = ssub.s32 %s16, 1
      %s22 = ssub.s32 %s16, 2
      %s23 = sadd.s32 %s16, 1
      %s24 = ssub.s32 %s16, %s23
      %p25 = scmp.eq.s32.totalorder %s24, 0
      %s27 = sadd.s32 %s26, 1
      %s28 = scalar_select %p25, %s26, %s27
      %p31 = pneg %p25
      %p32 = scmp.eq.s32.totalorder %s16, 1
      %p33 = por %p31, %p32
      %p34 = scmp.ne.s32.totalorder %s26, %s29
      %p35 = scmp.eq.s32.totalorder %s16, 0
      %p36 = por %p34, %p35
      %p37 = scmp.ne.s32.totalorder %s26, %s29
      %p38 = scmp.eq.s32.totalorder %s21, 1
      %p39 = por %p37, %p38
      %p40 = scmp.ne.s32.totalorder %s29, %s30
      %p41 = scmp.eq.s32.totalorder %s21, 0
      %p42 = por %p40, %p41
      %p43 = scmp.ne.s32.totalorder %s29, %s30
      %p44 = scmp.eq.s32.totalorder %s22, 1
      %p45 = por %p43, %p44
      %p47 = scmp.ne.s32.totalorder %s30, %s46
      %p48 = scmp.eq.s32.totalorder %s22, 0
      %p49 = por %p47, %p48
      %s51 = sadd.s32 %s50, 1
      %p54 = scmp.eq.s32.totalorder %s16, 1
      %p55 = scmp.ne.s32.totalorder %s50, %s52
      %p56 = scmp.eq.s32.totalorder %s16, 0
      %p57 = por %p55, %p56
      %p58 = scmp.ne.s32.totalorder %s50, %s52
      %p59 = scmp.eq.s32.totalorder %s21, 1
      %p60 = por %p58, %p59
      %p61 = scmp.ne.s32.totalorder %s52, %s53
      %p62 = scmp.eq.s32.totalorder %s21, 0
      %p63 = por %p61, %p62
      %p64 = scmp.ne.s32.totalorder %s52, %s53
      %p65 = scmp.eq.s32.totalorder %s22, 1
      %p66 = por %p64, %p65
      %p68 = scmp.ne.s32.totalorder %s53, %s67
      %p69 = scmp.eq.s32.totalorder %s22, 0
      %p70 = por %p68, %p69
      %s72 = sadd.s32 %s71, 1
      %p75 = scmp.eq.s32.totalorder %s16, 1
      %p76 = scmp.ne.s32.totalorder %s71, %s73
      %p77 = scmp.eq.s32.totalorder %s16, 0
      %p78 = por %p76, %p77
      %p79 = scmp.ne.s32.totalorder %s71, %s73
      %p80 = scmp.eq.s32.totalorder %s21, 1
      %p81 = por %p79, %p80
      %p82 = scmp.ne.s32.totalorder %s73, %s74
      %p83 = scmp.eq.s32.totalorder %s21, 0
      %p84 = por %p82, %p83
      %p85 = scmp.ne.s32.totalorder %s73, %s74
      %p86 = scmp.eq.s32.totalorder %s22, 1
      %p87 = por %p85, %p86
      %p89 = scmp.ne.s32.totalorder %s74, %s88
      %p90 = scmp.eq.s32.totalorder %s22, 0
      %p91 = por %p89, %p90
      %s92 = ssub.s32 %s16, %s23
      %p93 = scmp.eq.s32.totalorder %s92, 0
      %s95 = sadd.s32 %s94, 1
      %s96 = scalar_select %p93, %s94, %s95
      %p99 = pneg %p93
      %p100 = scmp.eq.s32.totalorder %s16, 1
      %p101 = por %p99, %p100
      %p102 = scmp.ne.s32.totalorder %s94, %s97
      %p103 = scmp.eq.s32.totalorder %s16, 0
      %p104 = por %p102, %p103
      %p105 = scmp.ne.s32.totalorder %s94, %s97
      %p106 = scmp.eq.s32.totalorder %s21, 1
      %p107 = por %p105, %p106
      %p108 = scmp.ne.s32.totalorder %s97, %s98
      %p109 = scmp.eq.s32.totalorder %s21, 0
      %p110 = por %p108, %p109
      %p111 = scmp.ne.s32.totalorder %s97, %s98
      %p112 = scmp.eq.s32.totalorder %s22, 1
      %p113 = por %p111, %p112
      %p115 = scmp.ne.s32.totalorder %s98, %s114
      %p116 = scmp.eq.s32.totalorder %s22, 0
      %p117 = por %p115, %p116
      %p118 = scmp.le.s32.totalorder 1, %s16
      %p119 = scmp.lt.s32.totalorder %s16, 3
      %p120 = pnand %p118, %p119
      %p121 = pneg %p120
      // Predicated region
      $region9: #{tpu_custom_call.1} parent=5 // pred_check
        _
      $region10: #{tpu_custom_call.1} parent=5 // pred_check_branch
        %123 = sbr.rel (%p120) target = $region12
      $region11: #{tpu_custom_call.1} parent=5 // pred_region
        %s124 = ssub.s32 %s16, 1
        // Predicated region
        $region13: #{tpu_custom_call.1} parent=11 // pred_check
          %p125 = pneg %p63
        $region14: #{tpu_custom_call.1} parent=11 // pred_check_branch
          %127 = sbr.rel (%p125) target = $region16
        $region15: #{tpu_custom_call.1} parent=11 // pred_region
          %129 = vsyncadd [#allocation6], 0
          %s131 = sshll.u32 %s1, 4
          %s132 = int_to_ptr.hbm [resolvable:$true] %s131
          %s133 = sshll.u32 [#allocation5], 4
          %s134 = int_to_ptr.vmem [resolvable:$true] %s133
          %136 = dma.hbm_to_vmem [thread:$0]  %s132, 96, %s134, [#allocation6]
        $region16: #{tpu_custom_call.1} parent=11 // pred_fallthru
          _
        // Predicated region
        $region17: #{tpu_custom_call.1} parent=11 // pred_check
          %p137 = pneg %p84
        $region18: #{tpu_custom_call.1} parent=11 // pred_check_branch
          %139 = sbr.rel (%p137) target = $region20
        $region19: #{tpu_custom_call.1} parent=11 // pred_region
          %141 = vsyncadd [#allocation6], 0
          %s143 = sshll.u32 %s2, 4
          %s144 = int_to_ptr.hbm [resolvable:$true] %s143
          %s145 = sshll.u32 [#allocation7], 4
          %s146 = int_to_ptr.vmem [resolvable:$true] %s145
          %148 = dma.hbm_to_vmem [thread:$0]  %s144, 96, %s146, [#allocation6]
        $region20: #{tpu_custom_call.1} parent=11 // pred_fallthru
          _
      $region12: #{tpu_custom_call.1} parent=5 // pred_fallthru
        _
      %p149 = scmp.lt.s32.totalorder %s16, 2
      // Predicated region
      $region21: #{tpu_custom_call.1} parent=5 // pred_check
        %p150 = pneg %p149
      $region22: #{tpu_custom_call.1} parent=5 // pred_check_branch
        %152 = sbr.rel (%p150) target = $region24
      $region23: #{tpu_custom_call.1} parent=5 // pred_region
        // Predicated region
        $region25: #{tpu_custom_call.1} parent=23 // pred_check
          %p153 = pneg %p36
        $region26: #{tpu_custom_call.1} parent=23 // pred_check_branch
          %155 = sbr.rel (%p153) target = $region28
        $region27: #{tpu_custom_call.1} parent=23 // pred_region
          %s156 = sand.u32 %s26, 1
          %s157 = scalar_lea.sflag [#allocation3], %s156
          %s158 = sand.u32 %s26, 1
          %s159 = smul.addr %s158, 48
          %s160 = scalar_lea.vmem [#allocation2], %s159
          %162 = vsyncadd %s157, 0
          %s163 = smul.addr %s16, 6
          %s164 = smul.addr %s163, 8
          %s165 = scalar_lea.hbm %s0, %s164
          %s167 = sshll.u32 %s165, 4
          %s168 = int_to_ptr.hbm [resolvable:$true] %s167
          %s169 = sshll.u32 %s160, 4
          %s170 = int_to_ptr.vmem [resolvable:$true] %s169
          %172 = dma.hbm_to_vmem [thread:$0]  %s168, 768, %s170, %s157
        $region28: #{tpu_custom_call.1} parent=23 // pred_fallthru
          _
      $region24: #{tpu_custom_call.1} parent=5 // pred_fallthru
        _
      %p173 = scmp.le.s32.totalorder 1, %s16
      %p174 = scmp.lt.s32.totalorder %s16, 3
      %p175 = pnand %p173, %p174
      %p176 = pneg %p175
      // Predicated region
      $region29: #{tpu_custom_call.1} parent=5 // pred_check
        _
      $region30: #{tpu_custom_call.1} parent=5 // pred_check_branch
        %178 = sbr.rel (%p175) target = $region32
      $region31: #{tpu_custom_call.1} parent=5 // pred_region
        %s179 = ssub.s32 %s16, 1
        %s180 = sand.u32 %s29, 1
        %s181 = scalar_lea.sflag [#allocation3], %s180
        %s182 = sand.u32 %s29, 1
        %s183 = smul.addr %s182, 48
        %s184 = scalar_lea.vmem [#allocation2], %s183
        // Predicated region
        $region33: #{tpu_custom_call.1} parent=31 // pred_check
          %p185 = pneg %p42
        $region34: #{tpu_custom_call.1} parent=31 // pred_check_branch
          %187 = sbr.rel (%p185) target = $region36
        $region35: #{tpu_custom_call.1} parent=31 // pred_region
          %189 = dma.done %s181, 768
        $region36: #{tpu_custom_call.1} parent=31 // pred_fallthru
          _
        // Predicated region
        $region37: #{tpu_custom_call.1} parent=31 // pred_check
          %p190 = pneg %p63
        $region38: #{tpu_custom_call.1} parent=31 // pred_check_branch
          %192 = sbr.rel (%p190) target = $region40
        $region39: #{tpu_custom_call.1} parent=31 // pred_region
          %194 = dma.done [#allocation6], 96
        $region40: #{tpu_custom_call.1} parent=31 // pred_fallthru
          _
        // Predicated region
        $region41: #{tpu_custom_call.1} parent=31 // pred_check
          %p195 = pneg %p84
        $region42: #{tpu_custom_call.1} parent=31 // pred_check_branch
          %197 = sbr.rel (%p195) target = $region44
        $region43: #{tpu_custom_call.1} parent=31 // pred_region
          %199 = dma.done [#allocation6], 96
        $region44: #{tpu_custom_call.1} parent=31 // pred_fallthru
          _
        %s200 = sand.u32 %s29, 1
        %s201 = scalar_lea.sflag [#allocation3], %s200
        %s202 = sand.u32 %s29, 1
        %s203 = smul.addr %s202, 48
        %s204 = scalar_lea.vmem [#allocation2], %s203
        %p205 = pneg %p42
        %p206 = pneg %p39
        %p207 = pneg %p63
        %p208 = pneg %p60
        %p209 = pneg %p84
        %p210 = pneg %p81
        %p211 = pneg %p110
        %p212 = pneg %p107
        %s213 = sand.u32 %s97, 1
        %s214 = scalar_lea.sflag [#allocation4], %s213
        %s215 = sand.u32 %s97, 1
        %s216 = smul.addr %s215, 48
        %s217 = scalar_lea.vmem [#allocation8], %s216
        %v218 = vld [vmem:[%s184] sm:$0xff]
        %v219 = vld [vmem:[%s184 + $0x8] sm:$0xff]
        %v220 = vld [vmem:[%s184 + $0x10] sm:$0xff]
        %v221 = vld [vmem:[%s184 + $0x18] sm:$0xff]
        %v222 = vld [vmem:[%s184 + $0x20] sm:$0xff]
        %v223 = vld [vmem:[%s184 + $0x28] sm:$0xff]
        %v224 = vadd.f32 %v218, %v219
        %v225 = vadd.f32 %v224, %v220
        %v226 = vadd.f32 %v225, %v221
        %v227 = vadd.f32 %v226, %v222
        %v228 = vadd.f32 %v227, %v223
        %229 = vadd.xlane.f32.xlu0 %v228
        %v230 = vpop.xlane.xlu0 %229
        %v231 = vrcp.pop 768.0
        %v232 = vmul.f32 768.0, %v231
        %v233 = vsub.f32 1.0, %v232
        %v234 = vmul.f32 %v231, %v233
        %v235 = vadd.f32 %v231, %v234
        %vm236 = vweird.f32 %v231
        %v237 = vsel %vm236, %v231, %v235
        %v238 = vmul.f32 %v230, %v237
        %v239 = vsub.f32 %v218, %v238
        %v240 = vsub.f32 %v219, %v238
        %v241 = vsub.f32 %v220, %v238
        %v242 = vsub.f32 %v221, %v238
        %v243 = vsub.f32 %v222, %v238
        %v244 = vsub.f32 %v223, %v238
        %v245 = vmul.f32 %v239, %v239
        %v246 = vmul.f32 %v240, %v240
        %v247 = vmul.f32 %v241, %v241
        %v248 = vmul.f32 %v242, %v242
        %v249 = vmul.f32 %v243, %v243
        %v250 = vmul.f32 %v244, %v244
        %v251 = vadd.f32 %v245, %v246
        %v252 = vadd.f32 %v251, %v247
        %v253 = vadd.f32 %v252, %v248
        %v254 = vadd.f32 %v253, %v249
        %v255 = vadd.f32 %v254, %v250
        %256 = vadd.xlane.f32.xlu0 %v255
        %v257 = vpop.xlane.xlu0 %256
        %v258 = vmul.f32 %v257, %v237
        %v259 = vadd.f32 %v258, 1e-05
        %v260 = vrsqrt.pop %v259
        %v261 = vmul.f32 %v260, %v259
        %v262 = vmul.f32 %v261, %v260
        %v263 = vmul.f32 0.5, %v262
        %v264 = vsub.f32 1.5, %v263
        %v265 = vmul.f32 %v260, %v264
        %vm266 = vweird.f32 %v259
        %vm267 = vweird.f32 %v260
        %vm268 = vmor %vm266, %vm267
        %v269 = vsel %vm268, %v260, %v265
        %v270 = vmul.f32 %v239, %v269
        %v271 = vmul.f32 %v240, %v269
        %v272 = vmul.f32 %v241, %v269
        %v273 = vmul.f32 %v242, %v269
        %v274 = vmul.f32 %v243, %v269
        %v275 = vmul.f32 %v244, %v269
        %v276 = vld [vmem:[#allocation5] sm:$0x3f]
        %v278 = vperm.slane %v276, 0
        %v279 = vperm.slane %v276, 1
        %v280 = vperm.slane %v276, 2
        %v281 = vperm.slane %v276, 3
        %v282 = vperm.slane %v276, 4
        %v283 = vperm.slane %v276, 5
        %v290 = vmul.f32 %v270, %v278
        %v291 = vmul.f32 %v271, %v279
        %v292 = vmul.f32 %v272, %v280
        %v293 = vmul.f32 %v273, %v281
        %v294 = vmul.f32 %v274, %v282
        %v295 = vmul.f32 %v275, %v283
        %v296 = vld [vmem:[#allocation7] sm:$0x3f]
        %v298 = vperm.slane %v296, 0
        %v299 = vperm.slane %v296, 1
        %v300 = vperm.slane %v296, 2
        %v301 = vperm.slane %v296, 3
        %v302 = vperm.slane %v296, 4
        %v303 = vperm.slane %v296, 5
        %v310 = vadd.f32 %v290, %v298
        %v311 = vadd.f32 %v291, %v299
        %v312 = vadd.f32 %v292, %v300
        %v313 = vadd.f32 %v293, %v301
        %v314 = vadd.f32 %v294, %v302
        %v315 = vadd.f32 %v295, %v303
        %316 = vst [vmem:[%s217] sm:$0xff] %v310
        %317 = vst [vmem:[%s217 + $0x8] sm:$0xff] %v311
        %318 = vst [vmem:[%s217 + $0x10] sm:$0xff] %v312
        %319 = vst [vmem:[%s217 + $0x18] sm:$0xff] %v313
        %320 = vst [vmem:[%s217 + $0x20] sm:$0xff] %v314
        %321 = vst [vmem:[%s217 + $0x28] sm:$0xff] %v315
        %s322 = sand.u32 %s97, 1
        %s323 = scalar_lea.sflag [#allocation4], %s322
        %s324 = sand.u32 %s97, 1
        %s325 = smul.addr %s324, 48
        %s326 = scalar_lea.vmem [#allocation8], %s325
        // Predicated region
        $region45: #{tpu_custom_call.1} parent=31 // pred_check
          %p327 = pneg %p107
        $region46: #{tpu_custom_call.1} parent=31 // pred_check_branch
          %329 = sbr.rel (%p327) target = $region48
        $region47: #{tpu_custom_call.1} parent=31 // pred_region
          %331 = vsyncadd %s323, 0
          %s332 = smul.addr %s21, 6
          %s333 = smul.addr %s332, 8
          %s334 = scalar_lea.hbm %s3, %s333
          %s336 = sshll.u32 %s326, 4
          %s337 = int_to_ptr.vmem [resolvable:$true] %s336
          %s338 = sshll.u32 %s334, 4
          %s339 = int_to_ptr.hbm [resolvable:$true] %s338
          %341 = dma.vmem_to_hbm [thread:$0]  %s337, 768, %s339, %s323
        $region48: #{tpu_custom_call.1} parent=31 // pred_fallthru
          _
      $region32: #{tpu_custom_call.1} parent=5 // pred_fallthru
        _
      %p342 = scmp.le.s32.totalorder 2, %s16
      // Predicated region
      $region49: #{tpu_custom_call.1} parent=5 // pred_check
        %p343 = pneg %p342
      $region50: #{tpu_custom_call.1} parent=5 // pred_check_branch
        %345 = sbr.rel (%p343) target = $region52
      $region51: #{tpu_custom_call.1} parent=5 // pred_region
        %s346 = ssub.s32 %s16, 2
        // Predicated region
        $region53: #{tpu_custom_call.1} parent=51 // pred_check
          %p347 = pneg %p113
        $region54: #{tpu_custom_call.1} parent=51 // pred_check_branch
          %349 = sbr.rel (%p347) target = $region56
        $region55: #{tpu_custom_call.1} parent=51 // pred_region
          %s350 = sand.u32 %s98, 1
          %s351 = scalar_lea.sflag [#allocation4], %s350
          %s352 = sand.u32 %s98, 1
          %s353 = smul.addr %s352, 48
          %s354 = scalar_lea.vmem [#allocation8], %s353
          %356 = dma.done %s351, 768
        $region56: #{tpu_custom_call.1} parent=51 // pred_fallthru
          _
      $region52: #{tpu_custom_call.1} parent=5 // pred_fallthru
        _
    $region6: #{tpu_custom_call.1} parent=1 // loop_footer
      %s20 = sadd.s32 1, %s16
    $region7: #{tpu_custom_call.1} parent=1 // loop_footer_branch
      %15 = sbr.rel target = $region3
    $region8: #{tpu_custom_call.1} parent=1 // loop_exit
      _
    %357 = vsyncpa [#allocation3], 1
    %s358 = scalar_lea.sflag [#allocation3], 1
    %359 = vsyncpa %s358, 1
    %360 = vsyncpa [#allocation6], 1
    %361 = vsyncpa [#allocation4], 1
    %s362 = scalar_lea.sflag [#allocation4], 1
    %363 = vsyncpa %s362, 1

</llo_original>
